<compile_context>
chip_gen: v7x
topology: tpu7x:2x2x1
jax: 0.10.0
libtpu: 0.0.40
codegen_flags: <defaults>
</compile_context>

<pallas_src>
import functools

import jax
import jax.numpy as jnp
from jax import lax
from jax.experimental import pallas as pl
from jax.experimental.pallas import tpu as pltpu


LOG_STD_MIN = -20.0   # kept for documentation; clamp(tanh(x)) is a no-op
LOG_STD_MAX = 2.0
LN_EPS = 1e-5         # nn.LayerNorm default
K_TILE_MAX = 1024     # max K (repr_dim) tile for the first matmul


def _round_up(x, m):
    return ((x + m - 1) // m) * m


def _pad_repr_dim(repr_dim):
    """Pad repr_dim to 128 lanes; at conv-encoder sizes, to a K_TILE_MAX multiple."""
    p = _round_up(repr_dim, 128)
    if p > K_TILE_MAX:
        p = _round_up(repr_dim, K_TILE_MAX)
    return p


def actor_simple_kernel(
    obs_ref,                                 # [TB, TK]        bf16
    w1_ref,                                  # [TK, F_pad]     bf16
    b1_ref, ln_g_ref, ln_b_ref,              # [1, F_pad]      f32
    w2_ref, b2_ref, w3_ref, b3_ref,          # policy Linear/ReLU x2
    wh_ref, bh_ref,                          # fused mu/log_std head
    out_ref,                                 # [TB, HEAD_PAD]  f32: mu | std | pad
    acc_ref,                                 # [TB, F_pad]     f32 scratch
    *, feature_dim, action_dim,
):
    k = pl.program_id(1)

    # ---- trunk Linear, K-tiled accumulation (first matmul) ----------------
    @pl.when(k == 0)
    def _():
        acc_ref[...] = jnp.zeros_like(acc_ref)

    acc_ref[...] += jnp.dot(obs_ref[...], w1_ref[...],
                            preferred_element_type=jnp.float32)

    # ---- finalize on the last K step ---------------------------------------
    @pl.when(k == pl.num_programs(1) - 1)
    def _():
        h = acc_ref[...] + b1_ref[...]

        # LayerNorm over the REAL feature_dim lanes, centered two-pass form.
        # Padded feature columns are exactly zero (zero weights / bias) so the
        # sum is unaffected; the centered residual is masked so padded lanes
        # don't pollute the variance.  gamma=0 / beta=0 on padded lanes keeps
        # them zero after the affine + tanh.
        inv_f = 1.0 / float(feature_dim)
        lane_f = lax.broadcasted_iota(jnp.int32, h.shape, 1)
        mean = jnp.sum(h, axis=-1, keepdims=True) * inv_f
        d = jnp.where(lane_f < feature_dim, h - mean, 0.0)
        var = jnp.sum(d * d, axis=-1, keepdims=True) * inv_f
        h = d * lax.rsqrt(var + LN_EPS)
        h = jnp.tanh(h * ln_g_ref[...] + ln_b_ref[...])

        # ---- policy: Linear -> ReLU -> Linear -> ReLU ----------------------
        h = jnp.dot(h.astype(jnp.bfloat16), w2_ref[...],
                    preferred_element_type=jnp.float32) + b2_ref[...]
        h = jnp.maximum(h, 0.0)
        h = jnp.dot(h.astype(jnp.bfloat16), w3_ref[...],
                    preferred_element_type=jnp.float32) + b3_ref[...]
        h = jnp.maximum(h, 0.0)

        # ---- fused heads: single MXU pass for mu and log_std ---------------
        fused = jnp.dot(h.astype(jnp.bfloat16), wh_ref[...],
                        preferred_element_type=jnp.float32) + bh_ref[...]
        # Reference: std = exp(clamp(tanh(log_std_head), -20, 2)); the clamp
        # can never fire after tanh, so it is dropped (identical semantics).
        std = jnp.exp(jnp.tanh(fused))

        # Lanes [0, A) carry mu (raw head output), [A, 2A) carry std; extra
        # lanes are padding (sliced off in the wrapper).  Single lane-dense vst.
        lane = lax.broadcasted_iota(jnp.int32, fused.shape, 1)
        out_ref[...] = jnp.where(lane < action_dim, fused, std)


def actor_simple_forward(obs, params, *, action_dim, feature_dim, batch_tile=256):
    """Returns (mu, std) — loc / scale of the WrapperNormal distribution."""
    B, R = obs.shape
    R_pad, F_pad = params["w1"].shape
    H_pad = params["w2"].shape[1]
    HEAD_PAD = params["wh"].shape[1]

    # ---- batch tiling -------------------------------------------------------
    # Small / medium batches: one block (no 128-cap padding blowup, no per-step
    # overhead).  Large batches: batch_tile-row tiles (default 256 feeds the
    # v6e/v7x 256-wide MXU and gives >= 2 "parallel" steps for both v7x TCs;
    # pass batch_tile=128 on v5e).
    B8 = _round_up(max(B, 1), 8)
    if B8 <= 512:
        TB = B8
    else:
        TB = _round_up(min(batch_tile, B8), 8)
    B_pad = _round_up(max(B, 1), TB)

    # ---- K (repr_dim) tiling ------------------------------------------------
    TK = min(R_pad, K_TILE_MAX)
    assert R_pad % TK == 0, "repr padding must be a multiple of the K tile"
    n_k = R_pad // TK

    # ---- obs: single cast-to-bf16 + pad (skipped when already aligned) ------
    obs_b = obs.astype(jnp.bfloat16)
    pad_b, pad_r = B_pad - B, R_pad - R
    if pad_b or pad_r:
        obs_b = jnp.pad(obs_b, ((0, pad_b), (0, pad_r)))

    args = (
        obs_b,
        params["w1"], params["b1"], params["ln_g"], params["ln_b"],
        params["w2"], params["b2"], params["w3"], params["b3"],
        params["wh"], params["bh"],
    )

    def resident(a):
        # Full-array block, same block index every step -> stays VMEM-resident.
        return pl.BlockSpec(a.shape, lambda i, k: (0,) * a.ndim)

    in_specs = [
        pl.BlockSpec((TB, TK), lambda i, k: (i, k)),        # obs
        pl.BlockSpec((TK, F_pad), lambda i, k: (k, 0)),     # w1 (K-tiled)
    ] + [resident(a) for a in args[2:]]
    out_spec = pl.BlockSpec((TB, HEAD_PAD), lambda i, k: (i, 0))

    flops = 2 * B_pad * (R_pad * F_pad + F_pad * H_pad + H_pad * H_pad
                         + H_pad * HEAD_PAD)
    transcendentals = B_pad * (F_pad + 2 * HEAD_PAD)
    bytes_accessed = int(
        sum(a.size * a.dtype.itemsize for a in args)   # obs + all params
        + B_pad * HEAD_PAD * 4                          # output slab
    )

    out = pl.pallas_call(
        functools.partial(actor_simple_kernel,
                          feature_dim=feature_dim, action_dim=action_dim),
        grid=(B_pad // TB, n_k),
        in_specs=in_specs,
        out_specs=out_spec,
        out_shape=jax.ShapeDtypeStruct((B_pad, HEAD_PAD), jnp.float32),
        scratch_shapes=[pltpu.VMEM((TB, F_pad), jnp.float32)],
        compiler_params=pltpu.CompilerParams(
            dimension_semantics=("parallel", "arbitrary")),
        cost_estimate=pl.CostEstimate(
            flops=int(flops),
            transcendentals=int(transcendentals),
            bytes_accessed=bytes_accessed),
    )(*args)

    mu = out[:B, :action_dim]
    std = out[:B, action_dim:2 * action_dim]
    return mu, std


def init_params(key, repr_dim, feature_dim, hidden_dim, action_dim):
    """Synthetic params, zero-padded to TPU-friendly shapes.

    Weights: bf16, layout [in_features, out_features] (transposed vs. PyTorch).
    Biases / LayerNorm params: f32, [1, features].
    """
    R_pad = _pad_repr_dim(repr_dim)
    F_pad = _round_up(feature_dim, 128)
    H_pad = _round_up(hidden_dim, 128)
    HEAD_PAD = _round_up(2 * action_dim, 128)

    ks = jax.random.split(key, 5)

    def linear(k, fan_in, fan_out, in_pad, out_pad):
        w = jax.random.normal(k, (fan_in, fan_out), jnp.float32) / jnp.sqrt(fan_in)
        w_p = jnp.zeros((in_pad, out_pad), jnp.float32).at[:fan_in, :fan_out].set(w)
        b_p = jnp.zeros((1, out_pad), jnp.float32)
        return w_p.astype(jnp.bfloat16), b_p

    w1, b1 = linear(ks[0], repr_dim, feature_dim, R_pad, F_pad)
    w2, b2 = linear(ks[1], feature_dim, hidden_dim, F_pad, H_pad)
    w3, b3 = linear(ks[2], hidden_dim, hidden_dim, H_pad, H_pad)

    # Fused head weight: mu in cols [0, A), log_std in cols [A, 2A).
    wmu = jax.random.normal(ks[3], (hidden_dim, action_dim), jnp.float32) / jnp.sqrt(hidden_dim)
    wls = jax.random.normal(ks[4], (hidden_dim, action_dim), jnp.float32) / jnp.sqrt(hidden_dim)
    wh = jnp.zeros((H_pad, HEAD_PAD), jnp.float32)
    wh = wh.at[:hidden_dim, :action_dim].set(wmu)
    wh = wh.at[:hidden_dim, action_dim:2 * action_dim].set(wls)
    bh = jnp.zeros((1, HEAD_PAD), jnp.float32)

    # LayerNorm affine: gamma=1 / beta=0 on real lanes, 0 on padded lanes so
    # padded features are exactly zeroed before the next matmul.
    ln_g = jnp.zeros((1, F_pad), jnp.float32).at[:, :feature_dim].set(1.0)
    ln_b = jnp.zeros((1, F_pad), jnp.float32)

    return dict(w1=w1, b1=b1, ln_g=ln_g, ln_b=ln_b,
                w2=w2, b2=b2, w3=w3, b3=b3,
                wh=wh.astype(jnp.bfloat16), bh=bh)


if __name__ == "__main__":
    B, repr_dim, feature_dim, hidden_dim, action_dim = 2, 32, 16, 32, 4

    key = jax.random.PRNGKey(0)
    k_obs, k_params = jax.random.split(key)
    obs = jax.random.normal(k_obs, (B, repr_dim), jnp.float32)
    params = init_params(k_params, repr_dim, feature_dim, hidden_dim, action_dim)

    fwd = jax.jit(actor_simple_forward,
                  static_argnames=("action_dim", "feature_dim", "batch_tile"))
    mu, std = fwd(obs, params, action_dim=action_dim, feature_dim=feature_dim)
    jax.block_until_ready((mu, std))

    assert mu.shape == (B, action_dim) and std.shape == (B, action_dim)
    assert bool(jnp.all(std > 0.0))
    assert bool(jnp.all(jnp.isfinite(mu))) and bool(jnp.all(jnp.isfinite(std)))
    print("KERNEL_OK")
</pallas_src>

<mosaic_0001>
module attributes {stable_mosaic.version = 11 : i64} {
  func.func @actor_simple_kernel(%arg0: i32, %arg1: i32, %arg2: memref<8x128xbf16, #tpu.memory_space<vmem>>, %arg3: memref<128x128xbf16, #tpu.memory_space<vmem>>, %arg4: memref<1x128xf32, #tpu.memory_space<vmem>>, %arg5: memref<1x128xf32, #tpu.memory_space<vmem>>, %arg6: memref<1x128xf32, #tpu.memory_space<vmem>>, %arg7: memref<128x128xbf16, #tpu.memory_space<vmem>>, %arg8: memref<1x128xf32, #tpu.memory_space<vmem>>, %arg9: memref<128x128xbf16, #tpu.memory_space<vmem>>, %arg10: memref<1x128xf32, #tpu.memory_space<vmem>>, %arg11: memref<128x128xbf16, #tpu.memory_space<vmem>>, %arg12: memref<1x128xf32, #tpu.memory_space<vmem>>, %arg13: memref<8x128xf32, #tpu.memory_space<vmem>>, %arg14: memref<8x128xf32, #tpu.memory_space<vmem>>) attributes {dimension_semantics = [#tpu.dimension_semantics<parallel>, #tpu.dimension_semantics<arbitrary>], iteration_bounds = array<i64: 1, 1>, scalar_prefetch = 0 : i64, scratch_operands = 1 : i64, tpu.core_type = #tpu.core_type<tc>, window_params = [{transform_indices = @transform_0, window_bounds = array<i64: 8, 128>}, {transform_indices = @transform_1, window_bounds = array<i64: 128, 128>}, {pipeline_mode = #tpu.pipeline_mode<synchronous>, transform_indices = @transform_2, window_bounds = array<i64: 1, 128>}, {pipeline_mode = #tpu.pipeline_mode<synchronous>, transform_indices = @transform_3, window_bounds = array<i64: 1, 128>}, {pipeline_mode = #tpu.pipeline_mode<synchronous>, transform_indices = @transform_4, window_bounds = array<i64: 1, 128>}, {pipeline_mode = #tpu.pipeline_mode<synchronous>, transform_indices = @transform_5, window_bounds = array<i64: 128, 128>}, {pipeline_mode = #tpu.pipeline_mode<synchronous>, transform_indices = @transform_6, window_bounds = array<i64: 1, 128>}, {pipeline_mode = #tpu.pipeline_mode<synchronous>, transform_indices = @transform_7, window_bounds = array<i64: 128, 128>}, {pipeline_mode = #tpu.pipeline_mode<synchronous>, transform_indices = @transform_8, window_bounds = array<i64: 1, 128>}, {pipeline_mode = #tpu.pipeline_mode<synchronous>, transform_indices = @transform_9, window_bounds = array<i64: 128, 128>}, {pipeline_mode = #tpu.pipeline_mode<synchronous>, transform_indices = @transform_10, window_bounds = array<i64: 1, 128>}, {transform_indices = @transform_11, window_bounds = array<i64: 8, 128>}]} {
    %c0_i32 = arith.constant 0 : i32
    %0 = arith.cmpi eq, %arg1, %c0_i32 : i32
    %1 = arith.extui %0 : i1 to i32
    %c0_i32_0 = arith.constant 0 : i32
    %2 = arith.cmpi ne, %1, %c0_i32_0 : i32
    scf.if %2 {
      %cst_10 = arith.constant 0.000000e+00 : f32
      %12 = vector.broadcast %cst_10 : f32 to vector<8x128xf32>
      %c0_11 = arith.constant 0 : index
      %c0_12 = arith.constant 0 : index
      %13 = vector.load %arg14[%c0_11, %c0_12] : memref<8x128xf32, #tpu.memory_space<vmem>>, vector<8x128xf32>
      tpu.vector_store %arg14[%c0_11, %c0_12], %12 {strides = array<i32>} : memref<8x128xf32, #tpu.memory_space<vmem>>, vector<8x128xf32>,
    } else {
    }
    %c0 = arith.constant 0 : index
    %c0_1 = arith.constant 0 : index
    %3 = vector.load %arg14[%c0, %c0_1] : memref<8x128xf32, #tpu.memory_space<vmem>>, vector<8x128xf32>
    %c0_2 = arith.constant 0 : index
    %c0_3 = arith.constant 0 : index
    %4 = vector.load %arg2[%c0_2, %c0_3] : memref<8x128xbf16, #tpu.memory_space<vmem>>, vector<8x128xbf16>
    %c0_4 = arith.constant 0 : index
    %c0_5 = arith.constant 0 : index
    %5 = vector.load %arg3[%c0_4, %c0_5] : memref<128x128xbf16, #tpu.memory_space<vmem>>, vector<128x128xbf16>
    %cst = arith.constant dense<0.000000e+00> : vector<8x128xf32>
    %6 = tpu.matmul %4, %5, %cst {dimension_numbers = #tpu.dot_dimension_numbers<[1], [0], [0], [1], [0, 0, 1, 1], [], []>} : vector<8x128xbf16>, vector<128x128xbf16>, vector<8x128xf32> -> vector<8x128xf32>
    %7 = arith.addf %3, %6 : vector<8x128xf32>
    %c0_6 = arith.constant 0 : index
    %c0_7 = arith.constant 0 : index
    %8 = vector.load %arg14[%c0_6, %c0_7] : memref<8x128xf32, #tpu.memory_space<vmem>>, vector<8x128xf32>
    tpu.vector_store %arg14[%c0_6, %c0_7], %7 {strides = array<i32>} : memref<8x128xf32, #tpu.memory_space<vmem>>, vector<8x128xf32>,
    %c0_i32_8 = arith.constant 0 : i32
    %9 = arith.cmpi eq, %arg1, %c0_i32_8 : i32
    %10 = arith.extui %9 : i1 to i32
    %c0_i32_9 = arith.constant 0 : i32
    %11 = arith.cmpi ne, %10, %c0_i32_9 : i32
    scf.if %11 {
      %c0_10 = arith.constant 0 : index
      %c0_11 = arith.constant 0 : index
      %12 = vector.load %arg14[%c0_10, %c0_11] : memref<8x128xf32, #tpu.memory_space<vmem>>, vector<8x128xf32>
      %c0_12 = arith.constant 0 : index
      %c0_13 = arith.constant 0 : index
      %13 = vector.load %arg4[%c0_12, %c0_13] : memref<1x128xf32, #tpu.memory_space<vmem>>, vector<1x128xf32>
      %14 = vector.broadcast %13 : vector<1x128xf32> to vector<8x128xf32>
      %15 = arith.addf %12, %14 : vector<8x128xf32>
      %16 = tpu.iota {dimensions = array<i32: 1>} : vector<8x128xi32>
      %cst_14 = arith.constant dense<0.000000e+00> : vector<8xf32>
      %17 = vector.multi_reduction <add>, %15, %cst_14 [1] : vector<8x128xf32> to vector<8xf32>
      %18 = vector.shape_cast %17 : vector<8xf32> to vector<8x1xf32>
      %cst_15 = arith.constant 6.250000e-02 : f32
      %19 = vector.broadcast %cst_15 : f32 to vector<8x1xf32>
      %20 = arith.mulf %18, %19 : vector<8x1xf32>
      %c16_i32 = arith.constant 16 : i32
      %21 = vector.broadcast %c16_i32 : i32 to vector<8x128xi32>
      %22 = arith.cmpi slt, %16, %21 : vector<8x128xi32>
      %23 = vector.broadcast %20 : vector<8x1xf32> to vector<8x128xf32>
      %24 = arith.subf %15, %23 : vector<8x128xf32>
      %cst_16 = arith.constant 0.000000e+00 : f32
      %25 = vector.broadcast %cst_16 : f32 to vector<8x128xf32>
      %26 = arith.select %22, %24, %25 : vector<8x128xi1>, vector<8x128xf32>
      %27 = arith.mulf %26, %26 : vector<8x128xf32>
      %cst_17 = arith.constant dense<0.000000e+00> : vector<8xf32>
      %28 = vector.multi_reduction <add>, %27, %cst_17 [1] : vector<8x128xf32> to vector<8xf32>
      %29 = vector.shape_cast %28 : vector<8xf32> to vector<8x1xf32>
      %cst_18 = arith.constant 6.250000e-02 : f32
      %30 = vector.broadcast %cst_18 : f32 to vector<8x1xf32>
      %31 = arith.mulf %29, %30 : vector<8x1xf32>
      %cst_19 = arith.constant 9.99999974E-6 : f32
      %32 = vector.broadcast %cst_19 : f32 to vector<8x1xf32>
      %33 = arith.addf %31, %32 : vector<8x1xf32>
      %34 = math.rsqrt %33 : vector<8x1xf32>
      %35 = vector.broadcast %34 : vector<8x1xf32> to vector<8x128xf32>
      %36 = arith.mulf %26, %35 : vector<8x128xf32>
      %c0_20 = arith.constant 0 : index
      %c0_21 = arith.constant 0 : index
      %37 = vector.load %arg5[%c0_20, %c0_21] : memref<1x128xf32, #tpu.memory_space<vmem>>, vector<1x128xf32>
      %38 = vector.broadcast %37 : vector<1x128xf32> to vector<8x128xf32>
      %39 = arith.mulf %36, %38 : vector<8x128xf32>
      %c0_22 = arith.constant 0 : index
      %c0_23 = arith.constant 0 : index
      %40 = vector.load %arg6[%c0_22, %c0_23] : memref<1x128xf32, #tpu.memory_space<vmem>>, vector<1x128xf32>
      %41 = vector.broadcast %40 : vector<1x128xf32> to vector<8x128xf32>
      %42 = arith.addf %39, %41 : vector<8x128xf32>
      %43 = math.tanh %42 : vector<8x128xf32>
      %44 = arith.truncf %43 : vector<8x128xf32> to vector<8x128xbf16>
      %c0_24 = arith.constant 0 : index
      %c0_25 = arith.constant 0 : index
      %45 = vector.load %arg7[%c0_24, %c0_25] : memref<128x128xbf16, #tpu.memory_space<vmem>>, vector<128x128xbf16>
      %cst_26 = arith.constant dense<0.000000e+00> : vector<8x128xf32>
      %46 = tpu.matmul %44, %45, %cst_26 {dimension_numbers = #tpu.dot_dimension_numbers<[1], [0], [0], [1], [0, 0, 1, 1], [], []>} : vector<8x128xbf16>, vector<128x128xbf16>, vector<8x128xf32> -> vector<8x128xf32>
      %c0_27 = arith.constant 0 : index
      %c0_28 = arith.constant 0 : index
      %47 = vector.load %arg8[%c0_27, %c0_28] : memref<1x128xf32, #tpu.memory_space<vmem>>, vector<1x128xf32>
      %48 = vector.broadcast %47 : vector<1x128xf32> to vector<8x128xf32>
      %49 = arith.addf %46, %48 : vector<8x128xf32>
      %cst_29 = arith.constant 0.000000e+00 : f32
      %50 = vector.broadcast %cst_29 : f32 to vector<8x128xf32>
      %51 = arith.maximumf %49, %50 : vector<8x128xf32>
      %52 = arith.truncf %51 : vector<8x128xf32> to vector<8x128xbf16>
      %c0_30 = arith.constant 0 : index
      %c0_31 = arith.constant 0 : index
      %53 = vector.load %arg9[%c0_30, %c0_31] : memref<128x128xbf16, #tpu.memory_space<vmem>>, vector<128x128xbf16>
      %cst_32 = arith.constant dense<0.000000e+00> : vector<8x128xf32>
      %54 = tpu.matmul %52, %53, %cst_32 {dimension_numbers = #tpu.dot_dimension_numbers<[1], [0], [0], [1], [0, 0, 1, 1], [], []>} : vector<8x128xbf16>, vector<128x128xbf16>, vector<8x128xf32> -> vector<8x128xf32>
      %c0_33 = arith.constant 0 : index
      %c0_34 = arith.constant 0 : index
      %55 = vector.load %arg10[%c0_33, %c0_34] : memref<1x128xf32, #tpu.memory_space<vmem>>, vector<1x128xf32>
      %56 = vector.broadcast %55 : vector<1x128xf32> to vector<8x128xf32>
      %57 = arith.addf %54, %56 : vector<8x128xf32>
      %cst_35 = arith.constant 0.000000e+00 : f32
      %58 = vector.broadcast %cst_35 : f32 to vector<8x128xf32>
      %59 = arith.maximumf %57, %58 : vector<8x128xf32>
      %60 = arith.truncf %59 : vector<8x128xf32> to vector<8x128xbf16>
      %c0_36 = arith.constant 0 : index
      %c0_37 = arith.constant 0 : index
      %61 = vector.load %arg11[%c0_36, %c0_37] : memref<128x128xbf16, #tpu.memory_space<vmem>>, vector<128x128xbf16>
      %cst_38 = arith.constant dense<0.000000e+00> : vector<8x128xf32>
      %62 = tpu.matmul %60, %61, %cst_38 {dimension_numbers = #tpu.dot_dimension_numbers<[1], [0], [0], [1], [0, 0, 1, 1], [], []>} : vector<8x128xbf16>, vector<128x128xbf16>, vector<8x128xf32> -> vector<8x128xf32>
      %c0_39 = arith.constant 0 : index
      %c0_40 = arith.constant 0 : index
      %63 = vector.load %arg12[%c0_39, %c0_40] : memref<1x128xf32, #tpu.memory_space<vmem>>, vector<1x128xf32>
      %64 = vector.broadcast %63 : vector<1x128xf32> to vector<8x128xf32>
      %65 = arith.addf %62, %64 : vector<8x128xf32>
      %66 = math.tanh %65 : vector<8x128xf32>
      %67 = math.exp %66 : vector<8x128xf32>
      %68 = tpu.iota {dimensions = array<i32: 1>} : vector<8x128xi32>
      %c4_i32 = arith.constant 4 : i32
      %69 = vector.broadcast %c4_i32 : i32 to vector<8x128xi32>
      %70 = arith.cmpi slt, %68, %69 : vector<8x128xi32>
      %71 = arith.select %70, %65, %67 : vector<8x128xi1>, vector<8x128xf32>
      %c0_41 = arith.constant 0 : index
      %c0_42 = arith.constant 0 : index
      %72 = vector.load %arg13[%c0_41, %c0_42] : memref<8x128xf32, #tpu.memory_space<vmem>>, vector<8x128xf32>
      tpu.vector_store %arg13[%c0_41, %c0_42], %71 {strides = array<i32>} : memref<8x128xf32, #tpu.memory_space<vmem>>, vector<8x128xf32>,
    } else {
    }
    return
  }
  func.func @transform_0(%arg0: i32, %arg1: i32) -> (i32, i32) {
    %c0_i32 = arith.constant 0 : i32
    return %arg0, %arg1 : i32, i32
  }
  func.func @transform_1(%arg0: i32, %arg1: i32) -> (i32, i32) {
    %c0_i32 = arith.constant 0 : i32
    %c0_i32_0 = arith.constant 0 : i32
    return %arg1, %c0_i32 : i32, i32
  }
  func.func @transform_2(%arg0: i32, %arg1: i32) -> (i32, i32) {
    %c0_i32 = arith.constant 0 : i32
    %c0_i32_0 = arith.constant 0 : i32
    %c0_i32_1 = arith.constant 0 : i32
    return %c0_i32, %c0_i32_0 : i32, i32
  }
  func.func @transform_3(%arg0: i32, %arg1: i32) -> (i32, i32) {
    %c0_i32 = arith.constant 0 : i32
    %c0_i32_0 = arith.constant 0 : i32
    %c0_i32_1 = arith.constant 0 : i32
    return %c0_i32, %c0_i32_0 : i32, i32
  }
  func.func @transform_4(%arg0: i32, %arg1: i32) -> (i32, i32) {
    %c0_i32 = arith.constant 0 : i32
    %c0_i32_0 = arith.constant 0 : i32
    %c0_i32_1 = arith.constant 0 : i32
    return %c0_i32, %c0_i32_0 : i32, i32
  }
  func.func @transform_5(%arg0: i32, %arg1: i32) -> (i32, i32) {
    %c0_i32 = arith.constant 0 : i32
    %c0_i32_0 = arith.constant 0 : i32
    %c0_i32_1 = arith.constant 0 : i32
    return %c0_i32, %c0_i32_0 : i32, i32
  }
  func.func @transform_6(%arg0: i32, %arg1: i32) -> (i32, i32) {
    %c0_i32 = arith.constant 0 : i32
    %c0_i32_0 = arith.constant 0 : i32
    %c0_i32_1 = arith.constant 0 : i32
    return %c0_i32, %c0_i32_0 : i32, i32
  }
  func.func @transform_7(%arg0: i32, %arg1: i32) -> (i32, i32) {
    %c0_i32 = arith.constant 0 : i32
    %c0_i32_0 = arith.constant 0 : i32
    %c0_i32_1 = arith.constant 0 : i32
    return %c0_i32, %c0_i32_0 : i32, i32
  }
  func.func @transform_8(%arg0: i32, %arg1: i32) -> (i32, i32) {
    %c0_i32 = arith.constant 0 : i32
    %c0_i32_0 = arith.constant 0 : i32
    %c0_i32_1 = arith.constant 0 : i32
    return %c0_i32, %c0_i32_0 : i32, i32
  }
  func.func @transform_9(%arg0: i32, %arg1: i32) -> (i32, i32) {
    %c0_i32 = arith.constant 0 : i32
    %c0_i32_0 = arith.constant 0 : i32
    %c0_i32_1 = arith.constant 0 : i32
    return %c0_i32, %c0_i32_0 : i32, i32
  }
  func.func @transform_10(%arg0: i32, %arg1: i32) -> (i32, i32) {
    %c0_i32 = arith.constant 0 : i32
    %c0_i32_0 = arith.constant 0 : i32
    %c0_i32_1 = arith.constant 0 : i32
    return %c0_i32, %c0_i32_0 : i32, i32
  }
  func.func @transform_11(%arg0: i32, %arg1: i32) -> (i32, i32) {
    %c0_i32 = arith.constant 0 : i32
    %c0_i32_0 = arith.constant 0 : i32
    return %arg0, %c0_i32 : i32, i32
  }
}

</mosaic_0001>

<llo_original>
// kernel: actor_simple_forward.1
$region0: #{actor_simple_forward.1}
  #allocation0 [shape = 'u32[]', space=smem, size = 0x4, offset = 0x4, fixed_abs, tag = 'smem constant byte address 0x4 - core index']
  #allocation1 [shape = 'u32[144,128]{1,0:T(1,128)}', space=vmem, size = 0x12000, scoped, tag = 'internal scratch']
  #allocation2 [shape = 'f32[8,128]{1,0:T(8,128)}', space=vmem, size = 0x1000, scoped, tag = 'scratch operand']
  %s0 = inlined_call_operand.vmem [shape: bf16[8,128], index: 0, kind: input, shape index: {}]
  %s1 = inlined_call_operand.hbm [shape: bf16[128,128], index: 1, kind: input, shape index: {}]
  %s2 = inlined_call_operand.vmem [shape: f32[1,128], index: 2, kind: input, shape index: {}]
  %s3 = inlined_call_operand.vmem [shape: f32[1,128], index: 3, kind: input, shape index: {}]
  %s4 = inlined_call_operand.vmem [shape: f32[1,128], index: 4, kind: input, shape index: {}]
  %s5 = inlined_call_operand.hbm [shape: bf16[128,128], index: 5, kind: input, shape index: {}]
  %s6 = inlined_call_operand.vmem [shape: f32[1,128], index: 6, kind: input, shape index: {}]
  %s7 = inlined_call_operand.hbm [shape: bf16[128,128], index: 7, kind: input, shape index: {}]
  %s8 = inlined_call_operand.vmem [shape: f32[1,128], index: 8, kind: input, shape index: {}]
  %s9 = inlined_call_operand.hbm [shape: bf16[128,128], index: 9, kind: input, shape index: {}]
  %s10 = inlined_call_operand.vmem [shape: f32[1,128], index: 10, kind: input, shape index: {}]
  %s11 = inlined_call_operand.vmem [shape: f32[8,128], index: 11, kind: output, shape index: {}]
  %s12 = sld [smem:[#allocation0]]
  $region78: #{actor_simple_forward.1} parent=0
    _
  %s14 = ssub.s32 1, %s12
  %s15 = scalar_select 0, %s14, %s12
  $region1: #{actor_simple_forward.1} parent=0
    #allocation3 [shape = 'u8[32768]{0}', space=vmem, size = 0x8000, scoped, tag = 'input window, operand 1, single buffered']
    #allocation4 [shape = 's32[1]{0}', space=sflag, size = 0x4, scoped, tag = 'scoped memory for actor_simple_forward.1']
    #allocation5 [shape = 'u8[32768]{0}', space=vmem, size = 0x8000, scoped, tag = 'input window, operand 5, single buffered']
    #allocation6 [shape = 's32[1]{0}', space=sflag, size = 0x4, scoped, tag = 'scoped memory for actor_simple_forward.1']
    #allocation7 [shape = 'u8[32768]{0}', space=vmem, size = 0x8000, scoped, tag = 'input window, operand 7, single buffered']
    #allocation8 [shape = 'u8[32768]{0}', space=vmem, size = 0x8000, scoped, tag = 'input window, operand 9, single buffered']
    #allocation9 [shape = 's32[1]{0}', space=sflag, size = 0x4, scoped, tag = 'scoped memory for actor_simple_forward.1']
    %16 = vsyncpa [#allocation4], 0
    %17 = vsyncpa [#allocation6], 0
    %18 = vsyncpa [#allocation9], 0
    // Predicated region
    $region2: #{actor_simple_forward.1} parent=1 // pred_check
      _
    $region3: #{actor_simple_forward.1} parent=1 // pred_check_branch
      %20 = sbr.rel (0) target = $region5
    $region4: #{actor_simple_forward.1} parent=1 // pred_region
      _
    $region5: #{actor_simple_forward.1} parent=1 // pred_fallthru
      _
    // Predicated region
    $region6: #{actor_simple_forward.1} parent=1 // pred_check
      _
    $region7: #{actor_simple_forward.1} parent=1 // pred_check_branch
      %22 = sbr.rel (0) target = $region9
    $region8: #{actor_simple_forward.1} parent=1 // pred_region
      %s24 = ssub.s32 1024, 1024
      %25 = vsyncadd [#allocation4], %s24
      %s26 = sshll.u32 [#allocation3], 4
      %s27 = int_to_ptr.vmem [resolvable:$true] %s26
      %32 = dma.hbm_to_vmem [thread:$0]  %s1, 1024, %s27, [#allocation4], 64, 64, 4
    $region9: #{actor_simple_forward.1} parent=1 // pred_fallthru
      _
    // Predicated region
    $region10: #{actor_simple_forward.1} parent=1 // pred_check
      _
    $region11: #{actor_simple_forward.1} parent=1 // pred_check_branch
      %34 = sbr.rel (0) target = $region13
    $region12: #{actor_simple_forward.1} parent=1 // pred_region
      _
    $region13: #{actor_simple_forward.1} parent=1 // pred_fallthru
      _
    // Predicated region
    $region14: #{actor_simple_forward.1} parent=1 // pred_check
      _
    $region15: #{actor_simple_forward.1} parent=1 // pred_check_branch
      %36 = sbr.rel (0) target = $region17
    $region16: #{actor_simple_forward.1} parent=1 // pred_region
      _
    $region17: #{actor_simple_forward.1} parent=1 // pred_fallthru
      _
    // Predicated region
    $region18: #{actor_simple_forward.1} parent=1 // pred_check
      _
    $region19: #{actor_simple_forward.1} parent=1 // pred_check_branch
      %38 = sbr.rel (0) target = $region21
    $region20: #{actor_simple_forward.1} parent=1 // pred_region
      _
    $region21: #{actor_simple_forward.1} parent=1 // pred_fallthru
      _
    // Predicated region
    $region22: #{actor_simple_forward.1} parent=1 // pred_check
      _
    $region23: #{actor_simple_forward.1} parent=1 // pred_check_branch
      %40 = sbr.rel (0) target = $region25
    $region24: #{actor_simple_forward.1} parent=1 // pred_region
      %s42 = ssub.s32 1024, 1024
      %43 = vsyncadd [#allocation6], %s42
      %s44 = sshll.u32 [#allocation5], 4
      %s45 = int_to_ptr.vmem [resolvable:$true] %s44
      %50 = dma.hbm_to_vmem [thread:$0]  %s5, 1024, %s45, [#allocation6], 64, 64, 4
    $region25: #{actor_simple_forward.1} parent=1 // pred_fallthru
      _
    // Predicated region
    $region26: #{actor_simple_forward.1} parent=1 // pred_check
      _
    $region27: #{actor_simple_forward.1} parent=1 // pred_check_branch
      %52 = sbr.rel (0) target = $region29
    $region28: #{actor_simple_forward.1} parent=1 // pred_region
      _
    $region29: #{actor_simple_forward.1} parent=1 // pred_fallthru
      _
    // Predicated region
    $region30: #{actor_simple_forward.1} parent=1 // pred_check
      _
    $region31: #{actor_simple_forward.1} parent=1 // pred_check_branch
      %54 = sbr.rel (0) target = $region33
    $region32: #{actor_simple_forward.1} parent=1 // pred_region
      %s56 = ssub.s32 1024, 1024
      %57 = vsyncadd [#allocation6], %s56
      %s58 = sshll.u32 [#allocation7], 4
      %s59 = int_to_ptr.vmem [resolvable:$true] %s58
      %64 = dma.hbm_to_vmem [thread:$0]  %s7, 1024, %s59, [#allocation6], 64, 64, 4
    $region33: #{actor_simple_forward.1} parent=1 // pred_fallthru
      _
    // Predicated region
    $region34: #{actor_simple_forward.1} parent=1 // pred_check
      _
    $region35: #{actor_simple_forward.1} parent=1 // pred_check_branch
      %66 = sbr.rel (0) target = $region37
    $region36: #{actor_simple_forward.1} parent=1 // pred_region
      _
    $region37: #{actor_simple_forward.1} parent=1 // pred_fallthru
      _
    // Predicated region
    $region38: #{actor_simple_forward.1} parent=1 // pred_check
      _
    $region39: #{actor_simple_forward.1} parent=1 // pred_check_branch
      %68 = sbr.rel (0) target = $region41
    $region40: #{actor_simple_forward.1} parent=1 // pred_region
      %s70 = ssub.s32 1024, 1024
      %71 = vsyncadd [#allocation9], %s70
      %s72 = sshll.u32 [#allocation8], 4
      %s73 = int_to_ptr.vmem [resolvable:$true] %s72
      %78 = dma.hbm_to_vmem [thread:$0]  %s9, 1024, %s73, [#allocation9], 64, 64, 4
    $region41: #{actor_simple_forward.1} parent=1 // pred_fallthru
      _
    // Predicated region
    $region42: #{actor_simple_forward.1} parent=1 // pred_check
      _
    $region43: #{actor_simple_forward.1} parent=1 // pred_check_branch
      %80 = sbr.rel (0) target = $region45
    $region44: #{actor_simple_forward.1} parent=1 // pred_region
      _
    $region45: #{actor_simple_forward.1} parent=1 // pred_fallthru
      _
    // Predicated region
    $region46: #{actor_simple_forward.1} parent=1 // pred_check
      _
    $region47: #{actor_simple_forward.1} parent=1 // pred_check_branch
      %82 = sbr.rel (0) target = $region49
    $region48: #{actor_simple_forward.1} parent=1 // pred_region
      %83 = dma.done [#allocation4], 1024
    $region49: #{actor_simple_forward.1} parent=1 // pred_fallthru
      _
    // Predicated region
    $region50: #{actor_simple_forward.1} parent=1 // pred_check
      _
    $region51: #{actor_simple_forward.1} parent=1 // pred_check_branch
      %85 = sbr.rel (0) target = $region53
    $region52: #{actor_simple_forward.1} parent=1 // pred_region
      %86 = dma.done [#allocation6], 1024
    $region53: #{actor_simple_forward.1} parent=1 // pred_fallthru
      _
    // Predicated region
    $region54: #{actor_simple_forward.1} parent=1 // pred_check
      _
    $region55: #{actor_simple_forward.1} parent=1 // pred_check_branch
      %88 = sbr.rel (0) target = $region57
    $region56: #{actor_simple_forward.1} parent=1 // pred_region
      %89 = dma.done [#allocation6], 1024
    $region57: #{actor_simple_forward.1} parent=1 // pred_fallthru
      _
    // Predicated region
    $region58: #{actor_simple_forward.1} parent=1 // pred_check
      _
    $region59: #{actor_simple_forward.1} parent=1 // pred_check_branch
      %91 = sbr.rel (0) target = $region61
    $region60: #{actor_simple_forward.1} parent=1 // pred_region
      %92 = dma.done [#allocation9], 1024
    $region61: #{actor_simple_forward.1} parent=1 // pred_fallthru
      _
    %p94 = scmp.eq.s32.totalorder 0, 0
    // Predicated region
    $region62: #{actor_simple_forward.1} parent=1 // pred_check
      %p95 = pneg %p94
    $region63: #{actor_simple_forward.1} parent=1 // pred_check_branch
      %97 = sbr.rel (%p95) target = $region65
    $region64: #{actor_simple_forward.1} parent=1 // pred_region
      %98 = vst [vmem:[#allocation2] sm:$0xff] 0.0
    $region65: #{actor_simple_forward.1} parent=1 // pred_fallthru
      _
    %v99 = vld [vmem:[#allocation2] sm:$0xff]
    %v100 = vld [vmem:[%s0] sm:$0xf]
    %v101 = vld [vmem:[#allocation3] sm:$0xf]
    %v102 = vld [vmem:[#allocation3 + $0x4] sm:$0xf]
    %v103 = vld [vmem:[#allocation3 + $0x8] sm:$0xf]
    %v104 = vld [vmem:[#allocation3 + $0xc] sm:$0xf]
    %v105 = vld [vmem:[#allocation3 + $0x10] sm:$0xf]
    %v106 = vld [vmem:[#allocation3 + $0x14] sm:$0xf]
    %v107 = vld [vmem:[#allocation3 + $0x18] sm:$0xf]
    %v108 = vld [vmem:[#allocation3 + $0x1c] sm:$0xf]
    %v109 = vld [vmem:[#allocation3 + $0x20] sm:$0xf]
    %v110 = vld [vmem:[#allocation3 + $0x24] sm:$0xf]
    %v111 = vld [vmem:[#allocation3 + $0x28] sm:$0xf]
    %v112 = vld [vmem:[#allocation3 + $0x2c] sm:$0xf]
    %v113 = vld [vmem:[#allocation3 + $0x30] sm:$0xf]
    %v114 = vld [vmem:[#allocation3 + $0x34] sm:$0xf]
    %v115 = vld [vmem:[#allocation3 + $0x38] sm:$0xf]
    %v116 = vld [vmem:[#allocation3 + $0x3c] sm:$0xf]
    %v133 = vunpack.c.l.b16 %v101
    %v134 = vunpack.c.l.b16 %v102
    %v135 = vunpack.c.l.b16 %v103
    %v136 = vunpack.c.l.b16 %v104
    %v137 = vunpack.c.l.b16 %v105
    %v138 = vunpack.c.l.b16 %v106
    %v139 = vunpack.c.l.b16 %v107
    %v140 = vunpack.c.l.b16 %v108
    %v141 = vunpack.c.l.b16 %v109
    %v142 = vunpack.c.l.b16 %v110
    %v143 = vunpack.c.l.b16 %v111
    %v144 = vunpack.c.l.b16 %v112
    %v145 = vunpack.c.l.b16 %v113
    %v146 = vunpack.c.l.b16 %v114
    %v147 = vunpack.c.l.b16 %v115
    %v148 = vunpack.c.l.b16 %v116
    %v149 = vpack.c.b16 %v134, %v133
    %v150 = vpack.c.b16 %v136, %v135
    %v151 = vpack.c.b16 %v138, %v137
    %v152 = vpack.c.b16 %v140, %v139
    %v153 = vpack.c.b16 %v142, %v141
    %v154 = vpack.c.b16 %v144, %v143
    %v155 = vpack.c.b16 %v146, %v145
    %v156 = vpack.c.b16 %v148, %v147
    %165 = vmatprep.subr.bf16.mxu0 0
    %166 = vmatpush1.bf16.msra.mxu0 %v149
    %167 = vmatprep.subr.bf16.mxu0 0
    %168 = vmatpush1.bf16.msra.mxu0 %v150
    %169 = vmatprep.subr.bf16.mxu0 0
    %170 = vmatpush1.bf16.msra.mxu0 %v151
    %171 = vmatprep.subr.bf16.mxu0 0
    %172 = vmatpush1.bf16.msra.mxu0 %v152
    %173 = vmatprep.subr.bf16.mxu0 0
    %174 = vmatpush1.bf16.msra.mxu0 %v153
    %175 = vmatprep.subr.bf16.mxu0 0
    %176 = vmatpush1.bf16.msra.mxu0 %v154
    %177 = vmatprep.subr.bf16.mxu0 0
    %178 = vmatpush1.bf16.msra.mxu0 %v155
    %179 = vmatprep.subr.bf16.mxu0 0
    %180 = vmatpush1.bf16.msra.mxu0 %v156
    %181 = vmatprep.subr.bf16.mxu0 0
    %182 = vmatpush1.bf16.msra.mxu0 0
    %183 = vmatprep.subr.bf16.mxu0 0
    %184 = vmatpush1.bf16.msra.mxu0 0
    %185 = vmatprep.subr.bf16.mxu0 0
    %186 = vmatpush1.bf16.msra.mxu0 0
    %187 = vmatprep.subr.bf16.mxu0 0
    %188 = vmatpush1.bf16.msra.mxu0 0
    %189 = vmatprep.subr.bf16.mxu0 0
    %190 = vmatpush1.bf16.msra.mxu0 0
    %191 = vmatprep.subr.bf16.mxu0 0
    %192 = vmatpush1.bf16.msra.mxu0 0
    %193 = vmatprep.subr.bf16.mxu0 0
    %194 = vmatpush1.bf16.msra.mxu0 0
    %195 = vmatprep.subr.bf16.mxu0 0
    %196 = vmatpush1.bf16.msra.mxu0 0
    %197 = vmatprep.mubr.bf16.mxu0 0
    %198 = vmatmul.mubr.bf16.gmra.mrb[0].mxu0 %v100
    %v199 = vpop.f32.mrb[0].mxu0
    %v200 = vadd.f32 0.0, %v199
    %v201 = vpop.f32.mrb[0].mxu0
    %v202 = vpop.f32.mrb[0].mxu0
    %v203 = vpop.f32.mrb[0].mxu0
    %204 = vdwg.mxu0
    %v205 = vadd.f32 %v99, %v200
    %206 = vst [vmem:[#allocation2] sm:$0xff] %v205
    // Predicated region
    $region66: #{actor_simple_forward.1} parent=1 // pred_check
      %p207 = pneg %p94
    $region67: #{actor_simple_forward.1} parent=1 // pred_check_branch
      %209 = sbr.rel (%p207) target = $region69
    $region68: #{actor_simple_forward.1} parent=1 // pred_region
      %v210 = vld [vmem:[#allocation2] sm:$0xff]
      %v211 = vld [vmem:[%s2] sm:$0x1]
      %v213 = vlaneseq
      %v214 = vshrl.u32 %v213, 7
      %v215 = vsub.s32 0, %v214
      %v216 = vrot.slane %v211, %v215
      %v218 = vadd.f32 %v210, %v216
      %v219 = vlaneseq
      %v220 = vand.u32 %v219, 127
      %221 = vadd.xlane.f32.xlu0 %v218
      %v222 = vpop.xlane.xlu0 %221
      %v223 = vmul.f32 %v222, 0.0625
      %vm224 = vcmp.lt.s32.totalorder %v220, 16
      %v225 = vsub.f32 %v218, %v223
      %v226 = vsel %vm224, %v225, 0.0
      %v227 = vmul.f32 %v226, %v226
      %228 = vadd.xlane.f32.xlu0 %v227
      %v229 = vpop.xlane.xlu0 %228
      %v230 = vmul.f32 %v229, 0.0625
      %v231 = vadd.f32 %v230, 1e-05
      %v232 = vrsqrt.pop %v231
      %v233 = vmul.f32 %v226, %v232
      %v234 = vld [vmem:[%s3] sm:$0x1]
      %v236 = vlaneseq
      %v237 = vshrl.u32 %v236, 7
      %v238 = vsub.s32 0, %v237
      %v239 = vrot.slane %v234, %v238
      %v241 = vmul.f32 %v233, %v239
      %v242 = vld [vmem:[%s4] sm:$0x1]
      %v244 = vlaneseq
      %v245 = vshrl.u32 %v244, 7
      %v246 = vsub.s32 0, %v245
      %v247 = vrot.slane %v242, %v246
      %v249 = vadd.f32 %v241, %v247
      %v250 = vtanh.pop %v249
      %v251 = vpack.c.bf16 %v250, %v250
      %v252 = vld [vmem:[#allocation5] sm:$0xf]
      %v253 = vld [vmem:[#allocation5 + $0x4] sm:$0xf]
      %v254 = vld [vmem:[#allocation5 + $0x8] sm:$0xf]
      %v255 = vld [vmem:[#allocation5 + $0xc] sm:$0xf]
      %v256 = vld [vmem:[#allocation5 + $0x10] sm:$0xf]
      %v257 = vld [vmem:[#allocation5 + $0x14] sm:$0xf]
      %v258 = vld [vmem:[#allocation5 + $0x18] sm:$0xf]
      %v259 = vld [vmem:[#allocation5 + $0x1c] sm:$0xf]
      %v260 = vld [vmem:[#allocation5 + $0x20] sm:$0xf]
      %v261 = vld [vmem:[#allocation5 + $0x24] sm:$0xf]
      %v262 = vld [vmem:[#allocation5 + $0x28] sm:$0xf]
      %v263 = vld [vmem:[#allocation5 + $0x2c] sm:$0xf]
      %v264 = vld [vmem:[#allocation5 + $0x30] sm:$0xf]
      %v265 = vld [vmem:[#allocation5 + $0x34] sm:$0xf]
      %v266 = vld [vmem:[#allocation5 + $0x38] sm:$0xf]
      %v267 = vld [vmem:[#allocation5 + $0x3c] sm:$0xf]
      %v268 = vld [vmem:[%s6] sm:$0x1]
      %v270 = vlaneseq
      %v271 = vshrl.u32 %v270, 7
      %v272 = vsub.s32 0, %v271
      %v273 = vrot.slane %v268, %v272
      %v291 = vunpack.c.l.b16 %v252
      %v292 = vunpack.c.l.b16 %v253
      %v293 = vunpack.c.l.b16 %v254
      %v294 = vunpack.c.l.b16 %v255
      %v295 = vunpack.c.l.b16 %v256
      %v296 = vunpack.c.l.b16 %v257
      %v297 = vunpack.c.l.b16 %v258
      %v298 = vunpack.c.l.b16 %v259
      %v299 = vunpack.c.l.b16 %v260
      %v300 = vunpack.c.l.b16 %v261
      %v301 = vunpack.c.l.b16 %v262
      %v302 = vunpack.c.l.b16 %v263
      %v303 = vunpack.c.l.b16 %v264
      %v304 = vunpack.c.l.b16 %v265
      %v305 = vunpack.c.l.b16 %v266
      %v306 = vunpack.c.l.b16 %v267
      %v307 = vpack.c.b16 %v292, %v291
      %v308 = vpack.c.b16 %v294, %v293
      %v309 = vpack.c.b16 %v296, %v295
      %v310 = vpack.c.b16 %v298, %v297
      %v311 = vpack.c.b16 %v300, %v299
      %v312 = vpack.c.b16 %v302, %v301
      %v313 = vpack.c.b16 %v304, %v303
      %v314 = vpack.c.b16 %v306, %v305
      %323 = vmatprep.subr.bf16.mxu0 0
      %324 = vmatpush1.bf16.msra.mxu0 %v307
      %325 = vmatprep.subr.bf16.mxu0 0
      %326 = vmatpush1.bf16.msra.mxu0 %v308
      %327 = vmatprep.subr.bf16.mxu0 0
      %328 = vmatpush1.bf16.msra.mxu0 %v309
      %329 = vmatprep.subr.bf16.mxu0 0
      %330 = vmatpush1.bf16.msra.mxu0 %v310
      %331 = vmatprep.subr.bf16.mxu0 0
      %332 = vmatpush1.bf16.msra.mxu0 %v311
      %333 = vmatprep.subr.bf16.mxu0 0
      %334 = vmatpush1.bf16.msra.mxu0 %v312
      %335 = vmatprep.subr.bf16.mxu0 0
      %336 = vmatpush1.bf16.msra.mxu0 %v313
      %337 = vmatprep.subr.bf16.mxu0 0
      %338 = vmatpush1.bf16.msra.mxu0 %v314
      %339 = vmatprep.subr.bf16.mxu0 0
      %340 = vmatpush1.bf16.msra.mxu0 0
      %341 = vmatprep.subr.bf16.mxu0 0
      %342 = vmatpush1.bf16.msra.mxu0 0
      %343 = vmatprep.subr.bf16.mxu0 0
      %344 = vmatpush1.bf16.msra.mxu0 0
      %345 = vmatprep.subr.bf16.mxu0 0
      %346 = vmatpush1.bf16.msra.mxu0 0
      %347 = vmatprep.subr.bf16.mxu0 0
      %348 = vmatpush1.bf16.msra.mxu0 0
      %349 = vmatprep.subr.bf16.mxu0 0
      %350 = vmatpush1.bf16.msra.mxu0 0
      %351 = vmatprep.subr.bf16.mxu0 0
      %352 = vmatpush1.bf16.msra.mxu0 0
      %353 = vmatprep.subr.bf16.mxu0 0
      %354 = vmatpush1.bf16.msra.mxu0 0
      %355 = vmatprep.mubr.bf16.mxu0 0
      %356 = vmatmul.mubr.bf16.gmra.mrb[0].mxu0 %v251
      %v357 = vpop.f32.mrb[0].mxu0
      %v358 = vadd.f32 %v273, %v357
      %v359 = vpop.f32.mrb[0].mxu0
      %v360 = vpop.f32.mrb[0].mxu0
      %v361 = vpop.f32.mrb[0].mxu0
      %362 = vdwg.mxu0
      %v363 = vmax.f32 %v358, 0.0
      %v364 = vpack.c.bf16 %v363, %v363
      %v365 = vld [vmem:[#allocation7] sm:$0xf]
      %v366 = vld [vmem:[#allocation7 + $0x4] sm:$0xf]
      %v367 = vld [vmem:[#allocation7 + $0x8] sm:$0xf]
      %v368 = vld [vmem:[#allocation7 + $0xc] sm:$0xf]
      %v369 = vld [vmem:[#allocation7 + $0x10] sm:$0xf]
      %v370 = vld [vmem:[#allocation7 + $0x14] sm:$0xf]
      %v371 = vld [vmem:[#allocation7 + $0x18] sm:$0xf]
      %v372 = vld [vmem:[#allocation7 + $0x1c] sm:$0xf]
      %v373 = vld [vmem:[#allocation7 + $0x20] sm:$0xf]
      %v374 = vld [vmem:[#allocation7 + $0x24] sm:$0xf]
      %v375 = vld [vmem:[#allocation7 + $0x28] sm:$0xf]
      %v376 = vld [vmem:[#allocation7 + $0x2c] sm:$0xf]
      %v377 = vld [vmem:[#allocation7 + $0x30] sm:$0xf]
      %v378 = vld [vmem:[#allocation7 + $0x34] sm:$0xf]
      %v379 = vld [vmem:[#allocation7 + $0x38] sm:$0xf]
      %v380 = vld [vmem:[#allocation7 + $0x3c] sm:$0xf]
      %v381 = vld [vmem:[%s8] sm:$0x1]
      %v383 = vlaneseq
      %v384 = vshrl.u32 %v383, 7
      %v385 = vsub.s32 0, %v384
      %v386 = vrot.slane %v381, %v385
      %v404 = vunpack.c.l.b16 %v365
      %v405 = vunpack.c.l.b16 %v366
      %v406 = vunpack.c.l.b16 %v367
      %v407 = vunpack.c.l.b16 %v368
      %v408 = vunpack.c.l.b16 %v369
      %v409 = vunpack.c.l.b16 %v370
      %v410 = vunpack.c.l.b16 %v371
      %v411 = vunpack.c.l.b16 %v372
      %v412 = vunpack.c.l.b16 %v373
      %v413 = vunpack.c.l.b16 %v374
      %v414 = vunpack.c.l.b16 %v375
      %v415 = vunpack.c.l.b16 %v376
      %v416 = vunpack.c.l.b16 %v377
      %v417 = vunpack.c.l.b16 %v378
      %v418 = vunpack.c.l.b16 %v379
      %v419 = vunpack.c.l.b16 %v380
      %v420 = vpack.c.b16 %v405, %v404
      %v421 = vpack.c.b16 %v407, %v406
      %v422 = vpack.c.b16 %v409, %v408
      %v423 = vpack.c.b16 %v411, %v410
      %v424 = vpack.c.b16 %v413, %v412
      %v425 = vpack.c.b16 %v415, %v414
      %v426 = vpack.c.b16 %v417, %v416
      %v427 = vpack.c.b16 %v419, %v418
      %436 = vmatprep.subr.bf16.mxu0 0
      %437 = vmatpush1.bf16.msra.mxu0 %v420
      %438 = vmatprep.subr.bf16.mxu0 0
      %439 = vmatpush1.bf16.msra.mxu0 %v421
      %440 = vmatprep.subr.bf16.mxu0 0
      %441 = vmatpush1.bf16.msra.mxu0 %v422
      %442 = vmatprep.subr.bf16.mxu0 0
      %443 = vmatpush1.bf16.msra.mxu0 %v423
      %444 = vmatprep.subr.bf16.mxu0 0
      %445 = vmatpush1.bf16.msra.mxu0 %v424
      %446 = vmatprep.subr.bf16.mxu0 0
      %447 = vmatpush1.bf16.msra.mxu0 %v425
      %448 = vmatprep.subr.bf16.mxu0 0
      %449 = vmatpush1.bf16.msra.mxu0 %v426
      %450 = vmatprep.subr.bf16.mxu0 0
      %451 = vmatpush1.bf16.msra.mxu0 %v427
      %452 = vmatprep.subr.bf16.mxu0 0
      %453 = vmatpush1.bf16.msra.mxu0 0
      %454 = vmatprep.subr.bf16.mxu0 0
      %455 = vmatpush1.bf16.msra.mxu0 0
      %456 = vmatprep.subr.bf16.mxu0 0
      %457 = vmatpush1.bf16.msra.mxu0 0
      %458 = vmatprep.subr.bf16.mxu0 0
      %459 = vmatpush1.bf16.msra.mxu0 0
      %460 = vmatprep.subr.bf16.mxu0 0
      %461 = vmatpush1.bf16.msra.mxu0 0
      %462 = vmatprep.subr.bf16.mxu0 0
      %463 = vmatpush1.bf16.msra.mxu0 0
      %464 = vmatprep.subr.bf16.mxu0 0
      %465 = vmatpush1.bf16.msra.mxu0 0
      %466 = vmatprep.subr.bf16.mxu0 0
      %467 = vmatpush1.bf16.msra.mxu0 0
      %468 = vmatprep.mubr.bf16.mxu0 0
      %469 = vmatmul.mubr.bf16.gmra.mrb[0].mxu0 %v364
      %v470 = vpop.f32.mrb[0].mxu0
      %v471 = vadd.f32 %v386, %v470
      %v472 = vpop.f32.mrb[0].mxu0
      %v473 = vpop.f32.mrb[0].mxu0
      %v474 = vpop.f32.mrb[0].mxu0
      %475 = vdwg.mxu0
      %v476 = vmax.f32 %v471, 0.0
      %v477 = vpack.c.bf16 %v476, %v476
      %v478 = vld [vmem:[#allocation8] sm:$0xf]
      %v479 = vld [vmem:[#allocation8 + $0x4] sm:$0xf]
      %v480 = vld [vmem:[#allocation8 + $0x8] sm:$0xf]
      %v481 = vld [vmem:[#allocation8 + $0xc] sm:$0xf]
      %v482 = vld [vmem:[#allocation8 + $0x10] sm:$0xf]
      %v483 = vld [vmem:[#allocation8 + $0x14] sm:$0xf]
      %v484 = vld [vmem:[#allocation8 + $0x18] sm:$0xf]
      %v485 = vld [vmem:[#allocation8 + $0x1c] sm:$0xf]
      %v486 = vld [vmem:[#allocation8 + $0x20] sm:$0xf]
      %v487 = vld [vmem:[#allocation8 + $0x24] sm:$0xf]
      %v488 = vld [vmem:[#allocation8 + $0x28] sm:$0xf]
      %v489 = vld [vmem:[#allocation8 + $0x2c] sm:$0xf]
      %v490 = vld [vmem:[#allocation8 + $0x30] sm:$0xf]
      %v491 = vld [vmem:[#allocation8 + $0x34] sm:$0xf]
      %v492 = vld [vmem:[#allocation8 + $0x38] sm:$0xf]
      %v493 = vld [vmem:[#allocation8 + $0x3c] sm:$0xf]
      %v494 = vld [vmem:[%s10] sm:$0x1]
      %v496 = vlaneseq
      %v497 = vshrl.u32 %v496, 7
      %v498 = vsub.s32 0, %v497
      %v499 = vrot.slane %v494, %v498
      %v517 = vunpack.c.l.b16 %v478
      %v518 = vunpack.c.l.b16 %v479
      %v519 = vunpack.c.l.b16 %v480
      %v520 = vunpack.c.l.b16 %v481
      %v521 = vunpack.c.l.b16 %v482
      %v522 = vunpack.c.l.b16 %v483
      %v523 = vunpack.c.l.b16 %v484
      %v524 = vunpack.c.l.b16 %v485
      %v525 = vunpack.c.l.b16 %v486
      %v526 = vunpack.c.l.b16 %v487
      %v527 = vunpack.c.l.b16 %v488
      %v528 = vunpack.c.l.b16 %v489
      %v529 = vunpack.c.l.b16 %v490
      %v530 = vunpack.c.l.b16 %v491
      %v531 = vunpack.c.l.b16 %v492
      %v532 = vunpack.c.l.b16 %v493
      %v533 = vpack.c.b16 %v518, %v517
      %v534 = vpack.c.b16 %v520, %v519
      %v535 = vpack.c.b16 %v522, %v521
      %v536 = vpack.c.b16 %v524, %v523
      %v537 = vpack.c.b16 %v526, %v525
      %v538 = vpack.c.b16 %v528, %v527
      %v539 = vpack.c.b16 %v530, %v529
      %v540 = vpack.c.b16 %v532, %v531
      %549 = vmatprep.subr.bf16.mxu0 0
      %550 = vmatpush1.bf16.msra.mxu0 %v533
      %551 = vmatprep.subr.bf16.mxu0 0
      %552 = vmatpush1.bf16.msra.mxu0 %v534
      %553 = vmatprep.subr.bf16.mxu0 0
      %554 = vmatpush1.bf16.msra.mxu0 %v535
      %555 = vmatprep.subr.bf16.mxu0 0
      %556 = vmatpush1.bf16.msra.mxu0 %v536
      %557 = vmatprep.subr.bf16.mxu0 0
      %558 = vmatpush1.bf16.msra.mxu0 %v537
      %559 = vmatprep.subr.bf16.mxu0 0
      %560 = vmatpush1.bf16.msra.mxu0 %v538
      %561 = vmatprep.subr.bf16.mxu0 0
      %562 = vmatpush1.bf16.msra.mxu0 %v539
      %563 = vmatprep.subr.bf16.mxu0 0
      %564 = vmatpush1.bf16.msra.mxu0 %v540
      %565 = vmatprep.subr.bf16.mxu0 0
      %566 = vmatpush1.bf16.msra.mxu0 0
      %567 = vmatprep.subr.bf16.mxu0 0
      %568 = vmatpush1.bf16.msra.mxu0 0
      %569 = vmatprep.subr.bf16.mxu0 0
      %570 = vmatpush1.bf16.msra.mxu0 0
      %571 = vmatprep.subr.bf16.mxu0 0
      %572 = vmatpush1.bf16.msra.mxu0 0
      %573 = vmatprep.subr.bf16.mxu0 0
      %574 = vmatpush1.bf16.msra.mxu0 0
      %575 = vmatprep.subr.bf16.mxu0 0
      %576 = vmatpush1.bf16.msra.mxu0 0
      %577 = vmatprep.subr.bf16.mxu0 0
      %578 = vmatpush1.bf16.msra.mxu0 0
      %579 = vmatprep.subr.bf16.mxu0 0
      %580 = vmatpush1.bf16.msra.mxu0 0
      %581 = vmatprep.mubr.bf16.mxu0 0
      %582 = vmatmul.mubr.bf16.gmra.mrb[0].mxu0 %v477
      %v583 = vpop.f32.mrb[0].mxu0
      %v584 = vadd.f32 %v499, %v583
      %v585 = vpop.f32.mrb[0].mxu0
      %v586 = vpop.f32.mrb[0].mxu0
      %v587 = vpop.f32.mrb[0].mxu0
      %588 = vdwg.mxu0
      %v589 = vtanh.pop %v584
      %v590 = vmul.f32 %v589, 1.442695
      %v591 = vpow.pop %v590
      %vm592 = vcmp.lt.s32.totalorder %v220, 4
      %v593 = vsel %vm592, %v584, %v591
      %594 = vst [vmem:[%s11] sm:$0xff] %v593
    $region69: #{actor_simple_forward.1} parent=1 // pred_fallthru
      _
    // Predicated region
    $region70: #{actor_simple_forward.1} parent=1 // pred_check
      _
    $region71: #{actor_simple_forward.1} parent=1 // pred_check_branch
      %596 = sbr.rel (0) target = $region73
    $region72: #{actor_simple_forward.1} parent=1 // pred_region
      _
    $region73: #{actor_simple_forward.1} parent=1 // pred_fallthru
      _
    // Predicated region
    $region74: #{actor_simple_forward.1} parent=1 // pred_check
      _
    $region75: #{actor_simple_forward.1} parent=1 // pred_check_branch
      %598 = sbr.rel (0) target = $region77
    $region76: #{actor_simple_forward.1} parent=1 // pred_region
      _
    $region77: #{actor_simple_forward.1} parent=1 // pred_fallthru
      _
    %599 = vsyncpa [#allocation4], 1
    %600 = vsyncpa [#allocation6], 1
    %601 = vsyncpa [#allocation9], 1

</llo_original>
